<compile_context>
chip_gen: v5e
topology: v5e:2x2
jax: 0.10.0
libtpu: 0.0.40
codegen_flags: <defaults>
</compile_context>

<pallas_src>
import functools

import jax
import jax.numpy as jnp
from jax import lax
from jax.experimental import pallas as pl
from jax.experimental.pallas import tpu as pltpu

_LANE = 128     # vreg lane width
_SUBLANE = 8    # vreg sublane count (f32)


def _round_up(x, m):
    return (x + m - 1) // m * m


def _make_fused_mlp_softmax_kernel(num_weights, act_dim):
    """o = softmax(relu(...relu(x @ W0)...) @ W_last), padded lanes masked out."""

    def kernel(x_ref, *refs):
        w_refs = refs[:num_weights]
        o_ref = refs[num_weights]

        cdt = x_ref.dtype
        h = x_ref[...]
        # Hidden layers: Linear(no bias) -> Dropout(identity at eval) -> ReLU.
        for w_ref in w_refs[:-1]:
            h = jnp.maximum(
                jnp.dot(h, w_ref[...], preferred_element_type=jnp.float32), 0.0
            ).astype(cdt)
        # Output layer: Linear(no bias) -> Softmax(dim=-1), f32 accumulate.
        logits = jnp.dot(h, w_refs[-1][...], preferred_element_type=jnp.float32)
        # Zero-padded action lanes must not dilute the softmax -> mask to -inf.
        lane_id = lax.broadcasted_iota(jnp.int32, logits.shape, 1)
        logits = jnp.where(lane_id < act_dim, logits, -jnp.inf)
        m = jnp.max(logits, axis=-1, keepdims=True)
        e = jnp.exp(logits - m)
        denom = jnp.sum(e, axis=-1, keepdims=True)
        o_ref[...] = (e * pl.reciprocal(denom, approx=True)).astype(o_ref.dtype)

    return kernel


def _forward_padded(state, weights, compute_dtype):
    B, obs_dim = state.shape
    act_dim = weights[-1].shape[1]
    dims = [obs_dim] + [w.shape[1] for w in weights]
    pdims = [_round_up(d, _LANE) for d in dims]

    # Batch tile: 512 rows for big RL rollouts (double-buffered DMA overlaps
    # MXU work); tiny batches just round up to the sublane.  512x128 f32 tiles
    # (in + out, double-buffered) + padded weights stay well under the scoped
    # VMEM limit on every generation, including v7x.
    tb = 512 if B >= 512 else _round_up(B, _SUBLANE)
    b_pad = _round_up(B, tb)

    # Zero-pad in the wrapper (exact: padded rows/cols contribute nothing).
    x_p = jnp.pad(state, ((0, b_pad - B), (0, pdims[0] - obs_dim)))
    x_p = x_p.astype(compute_dtype)
    w_p = [
        jnp.pad(w, ((0, pdims[i] - w.shape[0]), (0, pdims[i + 1] - w.shape[1])))
        .astype(compute_dtype)
        for i, w in enumerate(weights)
    ]

    kernel = _make_fused_mlp_softmax_kernel(len(weights), act_dim)

    in_specs = [pl.BlockSpec((tb, pdims[0]), lambda i: (i, 0))]
    for wp in w_p:
        # Full-block, constant index_map, explicit VMEM -> resident across grid.
        in_specs.append(
            pl.BlockSpec(wp.shape, lambda i: (0, 0),
                         memory_space=pltpu.MemorySpace.VMEM))
    out_specs = pl.BlockSpec((tb, pdims[-1]), lambda i: (i, 0))

    out = pl.pallas_call(
        kernel,
        out_shape=jax.ShapeDtypeStruct((b_pad, pdims[-1]), jnp.float32),
        grid=(b_pad // tb,),
        in_specs=in_specs,
        out_specs=out_specs,
        compiler_params=pltpu.CompilerParams(
            dimension_semantics=("parallel",)),
    )(x_p, *w_p)

    return out[:B, :act_dim]


@functools.partial(jax.jit, static_argnames=("compute_dtype",))
def categorical_policy_forward(state, *weights, compute_dtype=jnp.float32):
    """state: (batch, obs_dim) f32 -> action_probs: (batch, act_dim) f32."""
    return _forward_padded(state, list(weights), compute_dtype)


def init_params(key, obs_dim, act_dim, hid_sizes):
    """PyTorch-Linear-like init U[-1/sqrt(fan_in), 1/sqrt(fan_in)].
    Weights stored as (in_features, out_features) so y = x @ W."""
    dims = [obs_dim] + list(hid_sizes) + [act_dim]
    weights = []
    for i in range(len(dims) - 1):
        key, sub = jax.random.split(key)
        bound = 1.0 / (dims[i] ** 0.5)
        w = jax.random.uniform(
            sub, (dims[i], dims[i + 1]), dtype=jnp.float32,
            minval=-bound, maxval=bound)
        weights.append(w)
    return weights


if __name__ == "__main__":
    obs_dim, act_dim = 16, 8
    hid_sizes = [32, 32]
    batch = 2

    key = jax.random.PRNGKey(0)
    key, k_state = jax.random.split(key)
    state = jax.random.normal(k_state, (batch, obs_dim), dtype=jnp.float32)
    weights = init_params(key, obs_dim, act_dim, hid_sizes)

    probs = categorical_policy_forward(state, *weights)
    jax.block_until_ready(probs)

    # Pure-JAX reference (dropout is identity at eval).
    ref = state
    for w in weights[:-1]:
        ref = jnp.maximum(ref @ w, 0.0)
    ref = jax.nn.softmax(ref @ weights[-1], axis=-1)

    assert probs.shape == (batch, act_dim)
    # approx=True EUP reciprocal -> allow ~1e-3 relative slack.
    assert jnp.allclose(jnp.sum(probs, axis=-1), 1.0, atol=2e-3)
    assert jnp.allclose(probs, ref, atol=2e-3, rtol=2e-3)

    print("KERNEL_OK")
</pallas_src>

<mosaic_0001>
module attributes {stable_mosaic.version = 11 : i64} {
  func.func @kernel(%arg0: i32, %arg1: memref<8x128xf32, #tpu.memory_space<vmem>>, %arg2: memref<128x128xf32, #tpu.memory_space<vmem>>, %arg3: memref<128x128xf32, #tpu.memory_space<vmem>>, %arg4: memref<128x128xf32, #tpu.memory_space<vmem>>, %arg5: memref<8x128xf32, #tpu.memory_space<vmem>>) attributes {dimension_semantics = [#tpu.dimension_semantics<parallel>], iteration_bounds = array<i64: 1>, scalar_prefetch = 0 : i64, scratch_operands = 0 : i64, tpu.core_type = #tpu.core_type<tc>, window_params = [{transform_indices = @transform_0, window_bounds = array<i64: 8, 128>}, {pipeline_mode = #tpu.pipeline_mode<synchronous>, transform_indices = @transform_1, window_bounds = array<i64: 128, 128>}, {pipeline_mode = #tpu.pipeline_mode<synchronous>, transform_indices = @transform_2, window_bounds = array<i64: 128, 128>}, {pipeline_mode = #tpu.pipeline_mode<synchronous>, transform_indices = @transform_3, window_bounds = array<i64: 128, 128>}, {transform_indices = @transform_4, window_bounds = array<i64: 8, 128>}]} {
    %c0 = arith.constant 0 : index
    %c0_0 = arith.constant 0 : index
    %0 = vector.load %arg1[%c0, %c0_0] : memref<8x128xf32, #tpu.memory_space<vmem>>, vector<8x128xf32>
    %c0_1 = arith.constant 0 : index
    %c0_2 = arith.constant 0 : index
    %1 = vector.load %arg2[%c0_1, %c0_2] : memref<128x128xf32, #tpu.memory_space<vmem>>, vector<128x128xf32>
    %cst = arith.constant dense<0.000000e+00> : vector<8x128xf32>
    %2 = tpu.matmul %0, %1, %cst {dimension_numbers = #tpu.dot_dimension_numbers<[1], [0], [0], [1], [0, 0, 1, 1], [], []>} : vector<8x128xf32>, vector<128x128xf32>, vector<8x128xf32> -> vector<8x128xf32>
    %cst_3 = arith.constant 0.000000e+00 : f32
    %3 = vector.broadcast %cst_3 : f32 to vector<8x128xf32>
    %4 = arith.maximumf %2, %3 : vector<8x128xf32>
    %c0_4 = arith.constant 0 : index
    %c0_5 = arith.constant 0 : index
    %5 = vector.load %arg3[%c0_4, %c0_5] : memref<128x128xf32, #tpu.memory_space<vmem>>, vector<128x128xf32>
    %cst_6 = arith.constant dense<0.000000e+00> : vector<8x128xf32>
    %6 = tpu.matmul %4, %5, %cst_6 {dimension_numbers = #tpu.dot_dimension_numbers<[1], [0], [0], [1], [0, 0, 1, 1], [], []>} : vector<8x128xf32>, vector<128x128xf32>, vector<8x128xf32> -> vector<8x128xf32>
    %cst_7 = arith.constant 0.000000e+00 : f32
    %7 = vector.broadcast %cst_7 : f32 to vector<8x128xf32>
    %8 = arith.maximumf %6, %7 : vector<8x128xf32>
    %c0_8 = arith.constant 0 : index
    %c0_9 = arith.constant 0 : index
    %9 = vector.load %arg4[%c0_8, %c0_9] : memref<128x128xf32, #tpu.memory_space<vmem>>, vector<128x128xf32>
    %cst_10 = arith.constant dense<0.000000e+00> : vector<8x128xf32>
    %10 = tpu.matmul %8, %9, %cst_10 {dimension_numbers = #tpu.dot_dimension_numbers<[1], [0], [0], [1], [0, 0, 1, 1], [], []>} : vector<8x128xf32>, vector<128x128xf32>, vector<8x128xf32> -> vector<8x128xf32>
    %11 = tpu.iota {dimensions = array<i32: 1>} : vector<8x128xi32>
    %c8_i32 = arith.constant 8 : i32
    %12 = vector.broadcast %c8_i32 : i32 to vector<8x128xi32>
    %13 = arith.cmpi slt, %11, %12 : vector<8x128xi32>
    %cst_11 = arith.constant 0xFF800000 : f32
    %14 = vector.broadcast %cst_11 : f32 to vector<8x128xf32>
    %15 = arith.select %13, %10, %14 : vector<8x128xi1>, vector<8x128xf32>
    %cst_12 = arith.constant dense<0xFF800000> : vector<8xf32>
    %16 = vector.multi_reduction <maximumf>, %15, %cst_12 [1] : vector<8x128xf32> to vector<8xf32>
    %17 = vector.shape_cast %16 : vector<8xf32> to vector<8x1xf32>
    %18 = vector.broadcast %17 : vector<8x1xf32> to vector<8x128xf32>
    %19 = arith.subf %15, %18 : vector<8x128xf32>
    %20 = math.exp %19 : vector<8x128xf32>
    %cst_13 = arith.constant dense<0.000000e+00> : vector<8xf32>
    %21 = vector.multi_reduction <add>, %20, %cst_13 [1] : vector<8x128xf32> to vector<8xf32>
    %22 = vector.shape_cast %21 : vector<8xf32> to vector<8x1xf32>
    %23 = tpu.reciprocal %22 {approx = true} : vector<8x1xf32> -> vector<8x1xf32>
    %24 = vector.broadcast %23 : vector<8x1xf32> to vector<8x128xf32>
    %25 = arith.mulf %20, %24 : vector<8x128xf32>
    %c0_14 = arith.constant 0 : index
    %c0_15 = arith.constant 0 : index
    %26 = vector.load %arg5[%c0_14, %c0_15] : memref<8x128xf32, #tpu.memory_space<vmem>>, vector<8x128xf32>
    tpu.vector_store %arg5[%c0_14, %c0_15], %25 {strides = array<i32>} : memref<8x128xf32, #tpu.memory_space<vmem>>, vector<8x128xf32>,
    return
  }
  func.func @transform_0(%arg0: i32) -> (i32, i32) {
    %c0_i32 = arith.constant 0 : i32
    %c0_i32_0 = arith.constant 0 : i32
    return %arg0, %c0_i32 : i32, i32
  }
  func.func @transform_1(%arg0: i32) -> (i32, i32) {
    %c0_i32 = arith.constant 0 : i32
    %c0_i32_0 = arith.constant 0 : i32
    %c0_i32_1 = arith.constant 0 : i32
    return %c0_i32, %c0_i32_0 : i32, i32
  }
  func.func @transform_2(%arg0: i32) -> (i32, i32) {
    %c0_i32 = arith.constant 0 : i32
    %c0_i32_0 = arith.constant 0 : i32
    %c0_i32_1 = arith.constant 0 : i32
    return %c0_i32, %c0_i32_0 : i32, i32
  }
  func.func @transform_3(%arg0: i32) -> (i32, i32) {
    %c0_i32 = arith.constant 0 : i32
    %c0_i32_0 = arith.constant 0 : i32
    %c0_i32_1 = arith.constant 0 : i32
    return %c0_i32, %c0_i32_0 : i32, i32
  }
  func.func @transform_4(%arg0: i32) -> (i32, i32) {
    %c0_i32 = arith.constant 0 : i32
    %c0_i32_0 = arith.constant 0 : i32
    return %arg0, %c0_i32 : i32, i32
  }
}

</mosaic_0001>

<llo_original>
// kernel: categorical_policy_forward.1
$region0: #{categorical_policy_forward.1}
  #allocation0 [shape = 'u32[]', space=smem, size = 0x4, offset = 0x4, fixed_abs, tag = 'smem constant byte address 0x4 - core index']
  #allocation1 [shape = 'u32[72,128]{1,0:T(1,128)}', space=vmem, size = 0x9000, scoped, tag = 'internal scratch']
  %s0 = inlined_call_operand.vmem [shape: f32[8,128], index: 0, kind: input, shape index: {}]
  %s1 = inlined_call_operand.vmem [shape: f32[128,128], index: 1, kind: input, shape index: {}]
  %s2 = inlined_call_operand.vmem [shape: f32[128,128], index: 2, kind: input, shape index: {}]
  %s3 = inlined_call_operand.vmem [shape: f32[128,128], index: 3, kind: input, shape index: {}]
  %s4 = inlined_call_operand.vmem [shape: f32[8,128], index: 4, kind: output, shape index: {}]
  %s5 = sld [smem:[#allocation0]]
  $region26: #{categorical_policy_forward.1} parent=0
    _
  %s7 = ssub.s32 1, %s5
  %s8 = scalar_select 0, %s7, %s5
  // Predicated region
  $region2: #{categorical_policy_forward.1} parent=0 // pred_check
    _
  $region3: #{categorical_policy_forward.1} parent=0 // pred_check_branch
    %10 = sbr.rel (0) target = $region5
  $region4: #{categorical_policy_forward.1} parent=0 // pred_region
    _
  $region5: #{categorical_policy_forward.1} parent=0 // pred_fallthru
    _
  // Predicated region
  $region6: #{categorical_policy_forward.1} parent=0 // pred_check
    _
  $region7: #{categorical_policy_forward.1} parent=0 // pred_check_branch
    %12 = sbr.rel (0) target = $region9
  $region8: #{categorical_policy_forward.1} parent=0 // pred_region
    _
  $region9: #{categorical_policy_forward.1} parent=0 // pred_fallthru
    _
  // Predicated region
  $region10: #{categorical_policy_forward.1} parent=0 // pred_check
    _
  $region11: #{categorical_policy_forward.1} parent=0 // pred_check_branch
    %14 = sbr.rel (0) target = $region13
  $region12: #{categorical_policy_forward.1} parent=0 // pred_region
    _
  $region13: #{categorical_policy_forward.1} parent=0 // pred_fallthru
    _
  // Predicated region
  $region14: #{categorical_policy_forward.1} parent=0 // pred_check
    _
  $region15: #{categorical_policy_forward.1} parent=0 // pred_check_branch
    %16 = sbr.rel (0) target = $region17
  $region16: #{categorical_policy_forward.1} parent=0 // pred_region
    _
  $region17: #{categorical_policy_forward.1} parent=0 // pred_fallthru
    _
  %v17 = vld [vmem:[%s0] sm:$0xff]
  %v18 = vld [vmem:[%s1] sm:$0xff]
  %v19 = vld [vmem:[%s1 + $0x8] sm:$0xff]
  %v20 = vld [vmem:[%s1 + $0x10] sm:$0xff]
  %v21 = vld [vmem:[%s1 + $0x18] sm:$0xff]
  %v22 = vld [vmem:[%s1 + $0x20] sm:$0xff]
  %v23 = vld [vmem:[%s1 + $0x28] sm:$0xff]
  %v24 = vld [vmem:[%s1 + $0x30] sm:$0xff]
  %v25 = vld [vmem:[%s1 + $0x38] sm:$0xff]
  %v26 = vld [vmem:[%s1 + $0x40] sm:$0xff]
  %v27 = vld [vmem:[%s1 + $0x48] sm:$0xff]
  %v28 = vld [vmem:[%s1 + $0x50] sm:$0xff]
  %v29 = vld [vmem:[%s1 + $0x58] sm:$0xff]
  %v30 = vld [vmem:[%s1 + $0x60] sm:$0xff]
  %v31 = vld [vmem:[%s1 + $0x68] sm:$0xff]
  %v32 = vld [vmem:[%s1 + $0x70] sm:$0xff]
  %v33 = vld [vmem:[%s1 + $0x78] sm:$0xff]
  %34 = vmatpush.msra.mxu0 %v33
  %35 = vmatpush.msra.mxu0 %v32
  %36 = vmatpush.msra.mxu0 %v31
  %37 = vmatpush.msra.mxu0 %v30
  %38 = vmatpush.msra.mxu0 %v29
  %39 = vmatpush.msra.mxu0 %v28
  %40 = vmatpush.msra.mxu0 %v27
  %41 = vmatpush.msra.mxu0 %v26
  %42 = vmatpush.msra.mxu0 %v25
  %43 = vmatpush.msra.mxu0 %v24
  %44 = vmatpush.msra.mxu0 %v23
  %45 = vmatpush.msra.mxu0 %v22
  %46 = vmatpush.msra.mxu0 %v21
  %47 = vmatpush.msra.mxu0 %v20
  %48 = vmatpush.msra.mxu0 %v19
  %49 = vmatpush.msra.mxu0 %v18
  %50 = vmatmul.f32.gmra.mxu0 %v17
  %v51 = vpop.f32.mrf.mxu0
  %v52 = vadd.f32 0.0, %v51
  %53 = vdwg.mxu0
  %v54 = vmax.f32 %v52, 0.0
  %v55 = vld [vmem:[%s2] sm:$0xff]
  %v56 = vld [vmem:[%s2 + $0x8] sm:$0xff]
  %v57 = vld [vmem:[%s2 + $0x10] sm:$0xff]
  %v58 = vld [vmem:[%s2 + $0x18] sm:$0xff]
  %v59 = vld [vmem:[%s2 + $0x20] sm:$0xff]
  %v60 = vld [vmem:[%s2 + $0x28] sm:$0xff]
  %v61 = vld [vmem:[%s2 + $0x30] sm:$0xff]
  %v62 = vld [vmem:[%s2 + $0x38] sm:$0xff]
  %v63 = vld [vmem:[%s2 + $0x40] sm:$0xff]
  %v64 = vld [vmem:[%s2 + $0x48] sm:$0xff]
  %v65 = vld [vmem:[%s2 + $0x50] sm:$0xff]
  %v66 = vld [vmem:[%s2 + $0x58] sm:$0xff]
  %v67 = vld [vmem:[%s2 + $0x60] sm:$0xff]
  %v68 = vld [vmem:[%s2 + $0x68] sm:$0xff]
  %v69 = vld [vmem:[%s2 + $0x70] sm:$0xff]
  %v70 = vld [vmem:[%s2 + $0x78] sm:$0xff]
  %71 = vmatpush.msra.mxu0 %v70
  %72 = vmatpush.msra.mxu0 %v69
  %73 = vmatpush.msra.mxu0 %v68
  %74 = vmatpush.msra.mxu0 %v67
  %75 = vmatpush.msra.mxu0 %v66
  %76 = vmatpush.msra.mxu0 %v65
  %77 = vmatpush.msra.mxu0 %v64
  %78 = vmatpush.msra.mxu0 %v63
  %79 = vmatpush.msra.mxu0 %v62
  %80 = vmatpush.msra.mxu0 %v61
  %81 = vmatpush.msra.mxu0 %v60
  %82 = vmatpush.msra.mxu0 %v59
  %83 = vmatpush.msra.mxu0 %v58
  %84 = vmatpush.msra.mxu0 %v57
  %85 = vmatpush.msra.mxu0 %v56
  %86 = vmatpush.msra.mxu0 %v55
  %87 = vmatmul.f32.gmra.mxu0 %v54
  %v88 = vpop.f32.mrf.mxu0
  %v89 = vadd.f32 0.0, %v88
  %90 = vdwg.mxu0
  %v91 = vmax.f32 %v89, 0.0
  %v92 = vld [vmem:[%s3] sm:$0xff]
  %v93 = vld [vmem:[%s3 + $0x8] sm:$0xff]
  %v94 = vld [vmem:[%s3 + $0x10] sm:$0xff]
  %v95 = vld [vmem:[%s3 + $0x18] sm:$0xff]
  %v96 = vld [vmem:[%s3 + $0x20] sm:$0xff]
  %v97 = vld [vmem:[%s3 + $0x28] sm:$0xff]
  %v98 = vld [vmem:[%s3 + $0x30] sm:$0xff]
  %v99 = vld [vmem:[%s3 + $0x38] sm:$0xff]
  %v100 = vld [vmem:[%s3 + $0x40] sm:$0xff]
  %v101 = vld [vmem:[%s3 + $0x48] sm:$0xff]
  %v102 = vld [vmem:[%s3 + $0x50] sm:$0xff]
  %v103 = vld [vmem:[%s3 + $0x58] sm:$0xff]
  %v104 = vld [vmem:[%s3 + $0x60] sm:$0xff]
  %v105 = vld [vmem:[%s3 + $0x68] sm:$0xff]
  %v106 = vld [vmem:[%s3 + $0x70] sm:$0xff]
  %v107 = vld [vmem:[%s3 + $0x78] sm:$0xff]
  %108 = vmatpush.msra.mxu0 %v107
  %109 = vmatpush.msra.mxu0 %v106
  %110 = vmatpush.msra.mxu0 %v105
  %111 = vmatpush.msra.mxu0 %v104
  %112 = vmatpush.msra.mxu0 %v103
  %113 = vmatpush.msra.mxu0 %v102
  %114 = vmatpush.msra.mxu0 %v101
  %115 = vmatpush.msra.mxu0 %v100
  %116 = vmatpush.msra.mxu0 %v99
  %117 = vmatpush.msra.mxu0 %v98
  %118 = vmatpush.msra.mxu0 %v97
  %119 = vmatpush.msra.mxu0 %v96
  %120 = vmatpush.msra.mxu0 %v95
  %121 = vmatpush.msra.mxu0 %v94
  %122 = vmatpush.msra.mxu0 %v93
  %123 = vmatpush.msra.mxu0 %v92
  %124 = vmatmul.f32.gmra.mxu0 %v91
  %v125 = vpop.f32.mrf.mxu0
  %v126 = vadd.f32 0.0, %v125
  %127 = vdwg.mxu0
  %v128 = vlaneseq
  %v129 = vand.u32 %v128, 127
  %vm130 = vcmp.lt.s32.totalorder %v129, 8
  %v131 = vsel %vm130, %v126, -inf
  %132 = vmax.xlane.f32.xlu0 %v131
  %v133 = vpop.xlane.xlu0 %132
  %v134 = vsub.f32 %v131, %v133
  %v135 = vmul.f32 %v134, 1.442695
  %v136 = vpow.pop %v135
  %137 = vadd.xlane.f32.xlu0 %v136
  %v138 = vpop.xlane.xlu0 %137
  %v139 = vrcp.pop %v138
  %v140 = vmul.f32 %v136, %v139
  %141 = vst [vmem:[%s4] sm:$0xff] %v140
  // Predicated region
  $region18: #{categorical_policy_forward.1} parent=0 // pred_check
    _
  $region19: #{categorical_policy_forward.1} parent=0 // pred_check_branch
    %143 = sbr.rel (0) target = $region21
  $region20: #{categorical_policy_forward.1} parent=0 // pred_region
    _
  $region21: #{categorical_policy_forward.1} parent=0 // pred_fallthru
    _
  // Predicated region
  $region22: #{categorical_policy_forward.1} parent=0 // pred_check
    _
  $region23: #{categorical_policy_forward.1} parent=0 // pred_check_branch
    %145 = sbr.rel (0) target = $region25
  $region24: #{categorical_policy_forward.1} parent=0 // pred_region
    _
  $region25: #{categorical_policy_forward.1} parent=0 // pred_fallthru
    _

</llo_original>
